<compile_context>
chip_gen: v7x
topology: tpu7x:2x2x1
jax: 0.10.0
libtpu: 0.0.40
codegen_flags: <defaults>
</compile_context>

<pallas_src>
import functools

import jax
import jax.numpy as jnp
import numpy as np
from jax.experimental import pallas as pl
from jax.experimental.pallas import tpu as pltpu


def _stacked_lstm_kernel(x_ref, h0_ref, c0_ref, w_ref, b_ref,
                         h_out_ref, c_out_ref, xh_ref, *, hidden_size, max_in):
    """One LSTM layer per grid step; the layer input is carried in VMEM scratch."""
    H = hidden_size
    layer = pl.program_id(0)
    n_layers = pl.num_programs(0)

    # Layer 0 consumes the external input x (already padded to max_in lanes).
    @pl.when(layer == 0)
    def _():
        xh_ref[:, :max_in] = x_ref[...]

    # Current layer's previous hidden state occupies the trailing H lanes.
    xh_ref[:, max_in:] = h0_ref[...]

    # Single fused MXU pass: [x | h] @ [W_ih ; W_hh] + (b_ih + b_hh), f32 accumulate.
    gates = (
        jnp.dot(xh_ref[...], w_ref[...], preferred_element_type=jnp.float32)
        + b_ref[...].astype(jnp.float32)
    )

    # Gate order along 4H is [i, f, o, g] (permuted host-side):
    # one contiguous sigmoid over 3H lanes, one tanh over the last H lanes (EUP).
    sig = jax.nn.sigmoid(gates[:, :3 * H])
    g_g = jnp.tanh(gates[:, 3 * H:])
    i_g = sig[:, 0 * H:1 * H]
    f_g = sig[:, 1 * H:2 * H]
    o_g = sig[:, 2 * H:3 * H]

    c_new = f_g * c0_ref[...].astype(jnp.float32) + i_g * g_g
    h_new = o_g * jnp.tanh(c_new)

    h_out_ref[...] = h_new.astype(h_out_ref.dtype)
    c_out_ref[...] = c_new.astype(c_out_ref.dtype)

    # Carry h as the next layer's input.  Lanes [H:max_in] may hold stale layer-0
    # input values, but the corresponding stacked-weight rows are zero for layers
    # > 0, so they contribute exactly 0 to the fused matmul.  Skip on last layer.
    @pl.when(layer + 1 < n_layers)
    def _():
        xh_ref[:, :H] = h_new.astype(xh_ref.dtype)


def pack_params(params, input_size, rnn_size, dtype):
    """Pack per-layer (w_ih (In_l,4H), w_hh (H,4H), b (1,4H)) in PyTorch gate order
    [i,f,g,o] into stacked, fused, gate-permuted kernel weights."""
    H = rnn_size
    max_in = max(input_size, H)
    # [i, f, g, o] -> [i, f, o, g]
    perm = np.concatenate([np.arange(0, H), np.arange(H, 2 * H),
                           np.arange(3 * H, 4 * H), np.arange(2 * H, 3 * H)])
    ws, bs = [], []
    for (w_ih, w_hh, b) in params:
        in_l = w_ih.shape[0]
        w_ih_p = jnp.zeros((max_in, 4 * H), dtype).at[:in_l].set(w_ih.astype(dtype))
        w = jnp.concatenate([w_ih_p, w_hh.astype(dtype)], axis=0)  # (max_in+H, 4H)
        ws.append(w[:, perm])
        bs.append(b.astype(dtype)[:, perm])
    return jnp.stack(ws), jnp.stack(bs), max_in


def stacked_lstm_forward(x, hidden, w_stack, b_stack, *, rnn_size, max_in):
    """Mirrors StackedLSTM.forward for a single timestep.

    x: (B, input_size); hidden = (h0, c0) each (L, B, H).
    Returns (out, (h1, c1)), out == h1[-1].
    """
    h0, c0 = hidden
    L = w_stack.shape[0]
    B = x.shape[0]
    H = rnn_size
    dtype = x.dtype

    # Pad batch to a multiple of 8 sublanes and x lanes to max_in.
    Bp = ((B + 7) // 8) * 8
    x_p = jnp.zeros((Bp, max_in), dtype).at[:B, :x.shape[1]].set(x)
    h0_p = jnp.zeros((L, Bp, H), dtype).at[:, :B].set(h0)
    c0_p = jnp.zeros((L, Bp, H), dtype).at[:, :B].set(c0)

    kernel = functools.partial(_stacked_lstm_kernel, hidden_size=H, max_in=max_in)
    h1_p, c1_p = pl.pallas_call(
        kernel,
        out_shape=(
            jax.ShapeDtypeStruct((L, Bp, H), dtype),
            jax.ShapeDtypeStruct((L, Bp, H), dtype),
        ),
        grid_spec=pltpu.PrefetchScalarGridSpec(
            num_scalar_prefetch=0,
            grid=(L,),
            in_specs=[
                pl.BlockSpec((Bp, max_in), lambda l: (0, 0)),            # x (resident)
                pl.BlockSpec((None, Bp, H), lambda l: (l, 0, 0)),        # h0[l]
                pl.BlockSpec((None, Bp, H), lambda l: (l, 0, 0)),        # c0[l]
                pl.BlockSpec((None, max_in + H, 4 * H), lambda l: (l, 0, 0)),  # W[l] streamed
                pl.BlockSpec((None, 1, 4 * H), lambda l: (l, 0, 0)),     # b[l]
            ],
            out_specs=[
                pl.BlockSpec((None, Bp, H), lambda l: (l, 0, 0)),        # h1[l]
                pl.BlockSpec((None, Bp, H), lambda l: (l, 0, 0)),        # c1[l]
            ],
            scratch_shapes=[pltpu.VMEM((Bp, max_in + H), dtype)],        # [x | h] carry
        ),
        compiler_params=pltpu.CompilerParams(
            dimension_semantics=("arbitrary",)),                         # layer carry is sequential
    )(x_p, h0_p, c0_p, w_stack, b_stack)

    h1 = h1_p[:, :B]
    c1 = c1_p[:, :B]
    out = h1[-1]
    return out, (h1, c1)


# ----------------------------- pure-JAX reference -----------------------------
def _lstm_cell_ref(x, h, c, w_ih, w_hh, b):
    gates = x @ w_ih + h @ w_hh + b
    H = h.shape[-1]
    i_g = jax.nn.sigmoid(gates[:, 0 * H:1 * H])
    f_g = jax.nn.sigmoid(gates[:, 1 * H:2 * H])
    g_g = jnp.tanh(gates[:, 2 * H:3 * H])
    o_g = jax.nn.sigmoid(gates[:, 3 * H:4 * H])
    c_new = f_g * c + i_g * g_g
    h_new = o_g * jnp.tanh(c_new)
    return h_new, c_new


def _stacked_ref(x, hidden, params):
    h0, c0 = hidden
    h1, c1 = [], []
    inp = x
    for i, (w_ih, w_hh, b) in enumerate(params):
        h_i, c_i = _lstm_cell_ref(inp, h0[i], c0[i], w_ih, w_hh, b)
        inp = h_i
        h1.append(h_i)
        c1.append(c_i)
    return inp, (jnp.stack(h1), jnp.stack(c1))


if __name__ == "__main__":
    num_layers = 2
    batch = 4
    input_size = 64
    rnn_size = 32
    dtype = jnp.float32

    key = jax.random.PRNGKey(0)
    k_x, k_h, k_c, k_p = jax.random.split(key, 4)

    x = jax.random.normal(k_x, (batch, input_size), dtype)
    h0 = jax.random.normal(k_h, (num_layers, batch, rnn_size), dtype)
    c0 = jax.random.normal(k_c, (num_layers, batch, rnn_size), dtype)

    # Deterministic parameter init, PyTorch-style uniform(-1/sqrt(H), 1/sqrt(H)).
    # Per-layer layout: w_ih (In, 4H), w_hh (H, 4H), b (1, 4H), gate order [i,f,g,o].
    bound = 1.0 / np.sqrt(rnn_size)
    params = []
    in_sz = input_size
    pkeys = jax.random.split(k_p, num_layers)
    for i in range(num_layers):
        kw1, kw2, kb1, kb2 = jax.random.split(pkeys[i], 4)
        w_ih = jax.random.uniform(kw1, (in_sz, 4 * rnn_size), dtype, -bound, bound)
        w_hh = jax.random.uniform(kw2, (rnn_size, 4 * rnn_size), dtype, -bound, bound)
        b_ih = jax.random.uniform(kb1, (1, 4 * rnn_size), dtype, -bound, bound)
        b_hh = jax.random.uniform(kb2, (1, 4 * rnn_size), dtype, -bound, bound)
        params.append((w_ih, w_hh, b_ih + b_hh))
        in_sz = rnn_size

    # Pack for the fused kernel (zero-pad W_ih, fuse [W_ih;W_hh], permute gates).
    w_stack, b_stack, max_in = pack_params(params, input_size, rnn_size, dtype)

    out, (h1, c1) = stacked_lstm_forward(
        x, (h0, c0), w_stack, b_stack, rnn_size=rnn_size, max_in=max_in)
    jax.block_until_ready((out, h1, c1))

    out_r, (h1_r, c1_r) = _stacked_ref(x, (h0, c0), params)
    np.testing.assert_allclose(np.asarray(out), np.asarray(out_r), rtol=1e-5, atol=1e-5)
    np.testing.assert_allclose(np.asarray(h1), np.asarray(h1_r), rtol=1e-5, atol=1e-5)
    np.testing.assert_allclose(np.asarray(c1), np.asarray(c1_r), rtol=1e-5, atol=1e-5)

    assert out.shape == (batch, rnn_size)
    assert h1.shape == (num_layers, batch, rnn_size)
    assert c1.shape == (num_layers, batch, rnn_size)

    print("KERNEL_OK")
</pallas_src>

<mosaic_0001>
module attributes {stable_mosaic.version = 11 : i64} {
  func.func @_stacked_lstm_kernel(%arg0: i32, %arg1: memref<8x64xf32, #tpu.memory_space<vmem>>, %arg2: memref<1x8x32xf32, #tpu.memory_space<vmem>>, %arg3: memref<1x8x32xf32, #tpu.memory_space<vmem>>, %arg4: memref<1x96x128xf32, #tpu.memory_space<vmem>>, %arg5: memref<1x1x128xf32, #tpu.memory_space<vmem>>, %arg6: memref<1x8x32xf32, #tpu.memory_space<vmem>>, %arg7: memref<1x8x32xf32, #tpu.memory_space<vmem>>, %arg8: memref<8x96xf32, #tpu.memory_space<vmem>>) attributes {dimension_semantics = [#tpu.dimension_semantics<arbitrary>], iteration_bounds = array<i64: 2>, scalar_prefetch = 0 : i64, scratch_operands = 1 : i64, tpu.core_type = #tpu.core_type<tc>, window_params = [{pipeline_mode = #tpu.pipeline_mode<synchronous>, transform_indices = @transform_0, window_bounds = array<i64: 8, 64>}, {transform_indices = @transform_1, window_bounds = array<i64: 1, 8, 32>}, {transform_indices = @transform_2, window_bounds = array<i64: 1, 8, 32>}, {transform_indices = @transform_3, window_bounds = array<i64: 1, 96, 128>}, {transform_indices = @transform_4, window_bounds = array<i64: 1, 1, 128>}, {transform_indices = @transform_5, window_bounds = array<i64: 1, 8, 32>}, {transform_indices = @transform_6, window_bounds = array<i64: 1, 8, 32>}]} {
    %c0_i32 = arith.constant 0 : i32
    %0 = arith.cmpi eq, %arg0, %c0_i32 : i32
    %1 = arith.extui %0 : i1 to i32
    %c0_i32_0 = arith.constant 0 : i32
    %2 = arith.cmpi ne, %1, %c0_i32_0 : i32
    scf.if %2 {
      %c0_23 = arith.constant 0 : index
      %c0_24 = arith.constant 0 : index
      %42 = vector.load %arg1[%c0_23, %c0_24] : memref<8x64xf32, #tpu.memory_space<vmem>>, vector<8x64xf32>
      %c0_25 = arith.constant 0 : index
      %c0_26 = arith.constant 0 : index
      %43 = vector.load %arg8[%c0_25, %c0_26] : memref<8x96xf32, #tpu.memory_space<vmem>>, vector<8x64xf32>
      tpu.vector_store %arg8[%c0_25, %c0_26], %42 {strides = array<i32>} : memref<8x96xf32, #tpu.memory_space<vmem>>, vector<8x64xf32>,
    } else {
    }
    %c0 = arith.constant 0 : index
    %c0_1 = arith.constant 0 : index
    %c0_2 = arith.constant 0 : index
    %3 = vector.load %arg2[%c0, %c0_1, %c0_2] : memref<1x8x32xf32, #tpu.memory_space<vmem>>, vector<1x8x32xf32>
    %4 = vector.shape_cast %3 : vector<1x8x32xf32> to vector<8x32xf32>
    %c0_3 = arith.constant 0 : index
    %c64 = arith.constant 64 : index
    %5 = vector.load %arg8[%c0_3, %c64] : memref<8x96xf32, #tpu.memory_space<vmem>>, vector<8x32xf32>
    tpu.vector_store %arg8[%c0_3, %c64], %4 {strides = array<i32>} : memref<8x96xf32, #tpu.memory_space<vmem>>, vector<8x32xf32>,
    %c0_4 = arith.constant 0 : index
    %c0_5 = arith.constant 0 : index
    %6 = vector.load %arg8[%c0_4, %c0_5] : memref<8x96xf32, #tpu.memory_space<vmem>>, vector<8x96xf32>
    %c0_6 = arith.constant 0 : index
    %c0_7 = arith.constant 0 : index
    %c0_8 = arith.constant 0 : index
    %7 = vector.load %arg4[%c0_6, %c0_7, %c0_8] : memref<1x96x128xf32, #tpu.memory_space<vmem>>, vector<1x96x128xf32>
    %8 = vector.shape_cast %7 : vector<1x96x128xf32> to vector<96x128xf32>
    %cst = arith.constant dense<0.000000e+00> : vector<8x128xf32>
    %9 = tpu.matmul %6, %8, %cst {dimension_numbers = #tpu.dot_dimension_numbers<[1], [0], [0], [1], [0, 0, 1, 1], [], []>} : vector<8x96xf32>, vector<96x128xf32>, vector<8x128xf32> -> vector<8x128xf32>
    %c0_9 = arith.constant 0 : index
    %c0_10 = arith.constant 0 : index
    %c0_11 = arith.constant 0 : index
    %10 = vector.load %arg5[%c0_9, %c0_10, %c0_11] : memref<1x1x128xf32, #tpu.memory_space<vmem>>, vector<1x1x128xf32>
    %11 = vector.shape_cast %10 : vector<1x1x128xf32> to vector<1x128xf32>
    %12 = vector.broadcast %11 : vector<1x128xf32> to vector<8x128xf32>
    %13 = arith.addf %9, %12 : vector<8x128xf32>
    %14 = vector.extract_strided_slice %13 {offsets = [0, 0], sizes = [8, 96], strides = [1, 1]} : vector<8x128xf32> to vector<8x96xf32>
    %15 = arith.negf %14 : vector<8x96xf32>
    %16 = math.exp %15 : vector<8x96xf32>
    %cst_12 = arith.constant 1.000000e+00 : f32
    %17 = vector.broadcast %cst_12 : f32 to vector<8x96xf32>
    %18 = arith.addf %17, %16 : vector<8x96xf32>
    %19 = arith.divf %17, %18 : vector<8x96xf32>
    %20 = vector.extract_strided_slice %13 {offsets = [0, 96], sizes = [8, 32], strides = [1, 1]} : vector<8x128xf32> to vector<8x32xf32>
    %21 = math.tanh %20 : vector<8x32xf32>
    %22 = vector.extract_strided_slice %19 {offsets = [0, 0], sizes = [8, 32], strides = [1, 1]} : vector<8x96xf32> to vector<8x32xf32>
    %23 = vector.extract_strided_slice %19 {offsets = [0, 32], sizes = [8, 32], strides = [1, 1]} : vector<8x96xf32> to vector<8x32xf32>
    %24 = vector.extract_strided_slice %19 {offsets = [0, 64], sizes = [8, 32], strides = [1, 1]} : vector<8x96xf32> to vector<8x32xf32>
    %c0_13 = arith.constant 0 : index
    %c0_14 = arith.constant 0 : index
    %c0_15 = arith.constant 0 : index
    %25 = vector.load %arg3[%c0_13, %c0_14, %c0_15] : memref<1x8x32xf32, #tpu.memory_space<vmem>>, vector<1x8x32xf32>
    %26 = vector.shape_cast %25 : vector<1x8x32xf32> to vector<8x32xf32>
    %27 = arith.mulf %23, %26 : vector<8x32xf32>
    %28 = arith.mulf %22, %21 : vector<8x32xf32>
    %29 = arith.addf %27, %28 : vector<8x32xf32>
    %30 = math.tanh %29 : vector<8x32xf32>
    %31 = arith.mulf %24, %30 : vector<8x32xf32>
    %c0_16 = arith.constant 0 : index
    %c0_17 = arith.constant 0 : index
    %c0_18 = arith.constant 0 : index
    %32 = vector.load %arg6[%c0_16, %c0_17, %c0_18] : memref<1x8x32xf32, #tpu.memory_space<vmem>>, vector<1x8x32xf32>
    %33 = vector.shape_cast %32 : vector<1x8x32xf32> to vector<8x32xf32>
    %34 = vector.shape_cast %31 : vector<8x32xf32> to vector<1x8x32xf32>
    tpu.vector_store %arg6[%c0_16, %c0_17, %c0_18], %34 {strides = array<i32>} : memref<1x8x32xf32, #tpu.memory_space<vmem>>, vector<1x8x32xf32>,
    %c0_19 = arith.constant 0 : index
    %c0_20 = arith.constant 0 : index
    %c0_21 = arith.constant 0 : index
    %35 = vector.load %arg7[%c0_19, %c0_20, %c0_21] : memref<1x8x32xf32, #tpu.memory_space<vmem>>, vector<1x8x32xf32>
    %36 = vector.shape_cast %35 : vector<1x8x32xf32> to vector<8x32xf32>
    %37 = vector.shape_cast %29 : vector<8x32xf32> to vector<1x8x32xf32>
    tpu.vector_store %arg7[%c0_19, %c0_20, %c0_21], %37 {strides = array<i32>} : memref<1x8x32xf32, #tpu.memory_space<vmem>>, vector<1x8x32xf32>,
    %c1_i32 = arith.constant 1 : i32
    %38 = arith.addi %arg0, %c1_i32 : i32
    %c2_i32 = arith.constant 2 : i32
    %39 = arith.cmpi slt, %38, %c2_i32 : i32
    %40 = arith.extui %39 : i1 to i32
    %c0_i32_22 = arith.constant 0 : i32
    %41 = arith.cmpi ne, %40, %c0_i32_22 : i32
    scf.if %41 {
      %c0_23 = arith.constant 0 : index
      %c0_24 = arith.constant 0 : index
      %42 = vector.load %arg8[%c0_23, %c0_24] : memref<8x96xf32, #tpu.memory_space<vmem>>, vector<8x32xf32>
      tpu.vector_store %arg8[%c0_23, %c0_24], %31 {strides = array<i32>} : memref<8x96xf32, #tpu.memory_space<vmem>>, vector<8x32xf32>,
    } else {
    }
    return
  }
  func.func @transform_0(%arg0: i32) -> (i32, i32) {
    %c0_i32 = arith.constant 0 : i32
    %c0_i32_0 = arith.constant 0 : i32
    %c0_i32_1 = arith.constant 0 : i32
    return %c0_i32, %c0_i32_0 : i32, i32
  }
  func.func @transform_1(%arg0: i32) -> (i32, i32, i32) {
    %c0_i32 = arith.constant 0 : i32
    %c0_i32_0 = arith.constant 0 : i32
    %c0_i32_1 = arith.constant 0 : i32
    return %arg0, %c0_i32, %c0_i32_0 : i32, i32, i32
  }
  func.func @transform_2(%arg0: i32) -> (i32, i32, i32) {
    %c0_i32 = arith.constant 0 : i32
    %c0_i32_0 = arith.constant 0 : i32
    %c0_i32_1 = arith.constant 0 : i32
    return %arg0, %c0_i32, %c0_i32_0 : i32, i32, i32
  }
  func.func @transform_3(%arg0: i32) -> (i32, i32, i32) {
    %c0_i32 = arith.constant 0 : i32
    %c0_i32_0 = arith.constant 0 : i32
    %c0_i32_1 = arith.constant 0 : i32
    return %arg0, %c0_i32, %c0_i32_0 : i32, i32, i32
  }
  func.func @transform_4(%arg0: i32) -> (i32, i32, i32) {
    %c0_i32 = arith.constant 0 : i32
    %c0_i32_0 = arith.constant 0 : i32
    %c0_i32_1 = arith.constant 0 : i32
    return %arg0, %c0_i32, %c0_i32_0 : i32, i32, i32
  }
  func.func @transform_5(%arg0: i32) -> (i32, i32, i32) {
    %c0_i32 = arith.constant 0 : i32
    %c0_i32_0 = arith.constant 0 : i32
    %c0_i32_1 = arith.constant 0 : i32
    return %arg0, %c0_i32, %c0_i32_0 : i32, i32, i32
  }
  func.func @transform_6(%arg0: i32) -> (i32, i32, i32) {
    %c0_i32 = arith.constant 0 : i32
    %c0_i32_0 = arith.constant 0 : i32
    %c0_i32_1 = arith.constant 0 : i32
    return %arg0, %c0_i32, %c0_i32_0 : i32, i32, i32
  }
}

</mosaic_0001>

<llo_original>
// kernel: tpu_custom_call.1
$region0: #{tpu_custom_call.1}
  #allocation0 [shape = 'u32[]', space=smem, size = 0x4, offset = 0x4, fixed_abs, tag = 'smem constant byte address 0x4 - core index']
  #allocation1 [shape = 'u32[144,128]{1,0:T(1,128)}', space=vmem, size = 0x12000, scoped, tag = 'internal scratch']
  #allocation2 [shape = 'f32[8,96]{1,0:T(8,128)}', space=vmem, size = 0x1000, scoped, tag = 'scratch operand']
  %s0 = inlined_call_operand.hbm [shape: f32[8,64], index: 0, kind: input, shape index: {}]
  %s1 = inlined_call_operand.hbm [shape: f32[2,8,32], index: 1, kind: input, shape index: {}]
  %s2 = inlined_call_operand.hbm [shape: f32[2,8,32], index: 2, kind: input, shape index: {}]
  %s3 = inlined_call_operand.hbm [shape: f32[2,96,128], index: 3, kind: input, shape index: {}]
  %s4 = inlined_call_operand.vmem [shape: f32[2,1,128], index: 4, kind: input, shape index: {}]
  %s5 = inlined_call_operand.hbm [shape: f32[2,8,32], index: 5, kind: output, shape index: {0}]
  %s6 = inlined_call_operand.hbm [shape: f32[2,8,32], index: 6, kind: output, shape index: {1}]
  %7 = xla_tuple %s5, %s6
  %s8 = sld [smem:[#allocation0]]
  $region85: #{tpu_custom_call.1} parent=0
    _
  %s10 = ssub.s32 1, %s8
  %s11 = scalar_select 0, %s10, %s8
  $region1: #{tpu_custom_call.1} parent=0
    #allocation3 [shape = 'u8[4096]{0}', space=vmem, size = 0x1000, scoped, tag = 'input window, operand 0, single buffered']
    #allocation4 [shape = 's32[2]{0}', space=sflag, size = 0x8, scoped, tag = 'scoped memory for tpu_custom_call.1']
    #allocation5 [shape = 's32[2]{0}', space=sflag, size = 0x8, scoped, tag = 'scoped memory for tpu_custom_call.1']
    #allocation6 [shape = 'u8[8192]{0}', space=vmem, size = 0x2000, scoped, tag = 'input window, operand 1']
    #allocation7 [shape = 's32[2]{0}', space=sflag, size = 0x8, scoped, tag = 'scoped memory for tpu_custom_call.1']
    #allocation8 [shape = 'u8[8192]{0}', space=vmem, size = 0x2000, scoped, tag = 'input window, operand 2']
    #allocation9 [shape = 'u8[98304]{0}', space=vmem, size = 0x18000, scoped, tag = 'input window, operand 3']
    #allocation10 [shape = 's32[2]{0}', space=sflag, size = 0x8, scoped, tag = 'scoped memory for tpu_custom_call.1']
    #allocation11 [shape = 'u8[8192]{0}', space=vmem, size = 0x2000, scoped, tag = 'output window, operand 0']
    #allocation12 [shape = 'u8[8192]{0}', space=vmem, size = 0x2000, scoped, tag = 'output window, operand 1']
    #allocation13 [shape = 's32[2]{0}', space=sflag, size = 0x8, scoped, tag = 'scoped memory for tpu_custom_call.1']
    %12 = vsyncpa [#allocation4], 0
    %13 = vsyncpa [#allocation7], 0
    %s14 = scalar_lea.sflag [#allocation7], 1
    %15 = vsyncpa %s14, 0
    %16 = vsyncpa [#allocation10], 0
    %s17 = scalar_lea.sflag [#allocation10], 1
    %18 = vsyncpa %s17, 0
    %19 = vsyncpa [#allocation5], 0
    %s20 = scalar_lea.sflag [#allocation5], 1
    %21 = vsyncpa %s20, 0
    %22 = vsyncpa [#allocation13], 0
    %s23 = scalar_lea.sflag [#allocation13], 1
    %24 = vsyncpa %s23, 0
    loop: start=0, step=1, limit=4
    $region2: #{tpu_custom_call.1} parent=1 // loop_pre_header
      _
    $region3: #{tpu_custom_call.1} parent=1 // loop_header
      %s26 = sphi 0, %s30
      %p27 = scmp.ge.s32.totalorder %s26, 4
      %s34 = sphi 0, %s34
      %s36 = sphi 0, %s34
      %s37 = sphi 0, %s36
      %s51 = sphi 0, %s37
      %s57 = sphi 0, %s59
      %s60 = sphi 0, %s57
      %s61 = sphi 0, %s60
      %s77 = sphi 0, %s61
      %s83 = sphi 0, %s85
      %s86 = sphi 0, %s83
      %s87 = sphi 0, %s86
      %s103 = sphi 0, %s87
      %s109 = sphi 0, %s111
      %s112 = sphi 0, %s109
      %s113 = sphi 0, %s112
      %s129 = sphi 0, %s113
      %s135 = sphi 0, %s137
      %s138 = sphi 0, %s135
      %s139 = sphi 0, %s138
      %s155 = sphi 0, %s139
      %s161 = sphi 0, %s163
      %s164 = sphi 0, %s161
      %s165 = sphi 0, %s164
      %s181 = sphi 0, %s165
      %s187 = sphi 0, %s189
      %s190 = sphi 0, %s187
      %s191 = sphi 0, %s190
      %s207 = sphi 0, %s191
    $region4: #{tpu_custom_call.1} parent=1 // loop_header_branch
      %29 = sbr.rel (%p27) target = $region8
    $region5: #{tpu_custom_call.1} parent=1 // loop_body
      %s31 = ssub.s32 %s26, 1
      %s32 = ssub.s32 %s26, 2
      %s33 = sadd.s32 %s26, 1
      %s35 = sadd.s32 %s34, 1
      %p38 = scmp.eq.s32.totalorder %s26, 1
      %p39 = scmp.ne.s32.totalorder %s34, %s36
      %p40 = scmp.eq.s32.totalorder %s26, 0
      %p41 = por %p39, %p40
      %p42 = scmp.ne.s32.totalorder %s34, %s36
      %p43 = scmp.eq.s32.totalorder %s31, 1
      %p44 = por %p42, %p43
      %p45 = scmp.ne.s32.totalorder %s36, %s37
      %p46 = scmp.eq.s32.totalorder %s31, 0
      %p47 = por %p45, %p46
      %p48 = scmp.ne.s32.totalorder %s36, %s37
      %p49 = scmp.eq.s32.totalorder %s32, 1
      %p50 = por %p48, %p49
      %p52 = scmp.ne.s32.totalorder %s37, %s51
      %p53 = scmp.eq.s32.totalorder %s32, 0
      %p54 = por %p52, %p53
      %s55 = ssub.s32 %s26, %s33
      %p56 = scmp.eq.s32.totalorder %s55, 0
      %s58 = sadd.s32 %s57, 1
      %s59 = scalar_select %p56, %s57, %s58
      %p62 = pneg %p56
      %p63 = scmp.eq.s32.totalorder %s26, 1
      %p64 = por %p62, %p63
      %p65 = scmp.ne.s32.totalorder %s57, %s60
      %p66 = scmp.eq.s32.totalorder %s26, 0
      %p67 = por %p65, %p66
      %p68 = scmp.ne.s32.totalorder %s57, %s60
      %p69 = scmp.eq.s32.totalorder %s31, 1
      %p70 = por %p68, %p69
      %p71 = scmp.ne.s32.totalorder %s60, %s61
      %p72 = scmp.eq.s32.totalorder %s31, 0
      %p73 = por %p71, %p72
      %p74 = scmp.ne.s32.totalorder %s60, %s61
      %p75 = scmp.eq.s32.totalorder %s32, 1
      %p76 = por %p74, %p75
      %p78 = scmp.ne.s32.totalorder %s61, %s77
      %p79 = scmp.eq.s32.totalorder %s32, 0
      %p80 = por %p78, %p79
      %s81 = ssub.s32 %s26, %s33
      %p82 = scmp.eq.s32.totalorder %s81, 0
      %s84 = sadd.s32 %s83, 1
      %s85 = scalar_select %p82, %s83, %s84
      %p88 = pneg %p82
      %p89 = scmp.eq.s32.totalorder %s26, 1
      %p90 = por %p88, %p89
      %p91 = scmp.ne.s32.totalorder %s83, %s86
      %p92 = scmp.eq.s32.totalorder %s26, 0
      %p93 = por %p91, %p92
      %p94 = scmp.ne.s32.totalorder %s83, %s86
      %p95 = scmp.eq.s32.totalorder %s31, 1
      %p96 = por %p94, %p95
      %p97 = scmp.ne.s32.totalorder %s86, %s87
      %p98 = scmp.eq.s32.totalorder %s31, 0
      %p99 = por %p97, %p98
      %p100 = scmp.ne.s32.totalorder %s86, %s87
      %p101 = scmp.eq.s32.totalorder %s32, 1
      %p102 = por %p100, %p101
      %p104 = scmp.ne.s32.totalorder %s87, %s103
      %p105 = scmp.eq.s32.totalorder %s32, 0
      %p106 = por %p104, %p105
      %s107 = ssub.s32 %s26, %s33
      %p108 = scmp.eq.s32.totalorder %s107, 0
      %s110 = sadd.s32 %s109, 1
      %s111 = scalar_select %p108, %s109, %s110
      %p114 = pneg %p108
      %p115 = scmp.eq.s32.totalorder %s26, 1
      %p116 = por %p114, %p115
      %p117 = scmp.ne.s32.totalorder %s109, %s112
      %p118 = scmp.eq.s32.totalorder %s26, 0
      %p119 = por %p117, %p118
      %p120 = scmp.ne.s32.totalorder %s109, %s112
      %p121 = scmp.eq.s32.totalorder %s31, 1
      %p122 = por %p120, %p121
      %p123 = scmp.ne.s32.totalorder %s112, %s113
      %p124 = scmp.eq.s32.totalorder %s31, 0
      %p125 = por %p123, %p124
      %p126 = scmp.ne.s32.totalorder %s112, %s113
      %p127 = scmp.eq.s32.totalorder %s32, 1
      %p128 = por %p126, %p127
      %p130 = scmp.ne.s32.totalorder %s113, %s129
      %p131 = scmp.eq.s32.totalorder %s32, 0
      %p132 = por %p130, %p131
      %s133 = ssub.s32 %s26, %s33
      %p134 = scmp.eq.s32.totalorder %s133, 0
      %s136 = sadd.s32 %s135, 1
      %s137 = scalar_select %p134, %s135, %s136
      %p140 = pneg %p134
      %p141 = scmp.eq.s32.totalorder %s26, 1
      %p142 = por %p140, %p141
      %p143 = scmp.ne.s32.totalorder %s135, %s138
      %p144 = scmp.eq.s32.totalorder %s26, 0
      %p145 = por %p143, %p144
      %p146 = scmp.ne.s32.totalorder %s135, %s138
      %p147 = scmp.eq.s32.totalorder %s31, 1
      %p148 = por %p146, %p147
      %p149 = scmp.ne.s32.totalorder %s138, %s139
      %p150 = scmp.eq.s32.totalorder %s31, 0
      %p151 = por %p149, %p150
      %p152 = scmp.ne.s32.totalorder %s138, %s139
      %p153 = scmp.eq.s32.totalorder %s32, 1
      %p154 = por %p152, %p153
      %p156 = scmp.ne.s32.totalorder %s139, %s155
      %p157 = scmp.eq.s32.totalorder %s32, 0
      %p158 = por %p156, %p157
      %s159 = ssub.s32 %s26, %s33
      %p160 = scmp.eq.s32.totalorder %s159, 0
      %s162 = sadd.s32 %s161, 1
      %s163 = scalar_select %p160, %s161, %s162
      %p166 = pneg %p160
      %p167 = scmp.eq.s32.totalorder %s26, 1
      %p168 = por %p166, %p167
      %p169 = scmp.ne.s32.totalorder %s161, %s164
      %p170 = scmp.eq.s32.totalorder %s26, 0
      %p171 = por %p169, %p170
      %p172 = scmp.ne.s32.totalorder %s161, %s164
      %p173 = scmp.eq.s32.totalorder %s31, 1
      %p174 = por %p172, %p173
      %p175 = scmp.ne.s32.totalorder %s164, %s165
      %p176 = scmp.eq.s32.totalorder %s31, 0
      %p177 = por %p175, %p176
      %p178 = scmp.ne.s32.totalorder %s164, %s165
      %p179 = scmp.eq.s32.totalorder %s32, 1
      %p180 = por %p178, %p179
      %p182 = scmp.ne.s32.totalorder %s165, %s181
      %p183 = scmp.eq.s32.totalorder %s32, 0
      %p184 = por %p182, %p183
      %s185 = ssub.s32 %s26, %s33
      %p186 = scmp.eq.s32.totalorder %s185, 0
      %s188 = sadd.s32 %s187, 1
      %s189 = scalar_select %p186, %s187, %s188
      %p192 = pneg %p186
      %p193 = scmp.eq.s32.totalorder %s26, 1
      %p194 = por %p192, %p193
      %p195 = scmp.ne.s32.totalorder %s187, %s190
      %p196 = scmp.eq.s32.totalorder %s26, 0
      %p197 = por %p195, %p196
      %p198 = scmp.ne.s32.totalorder %s187, %s190
      %p199 = scmp.eq.s32.totalorder %s31, 1
      %p200 = por %p198, %p199
      %p201 = scmp.ne.s32.totalorder %s190, %s191
      %p202 = scmp.eq.s32.totalorder %s31, 0
      %p203 = por %p201, %p202
      %p204 = scmp.ne.s32.totalorder %s190, %s191
      %p205 = scmp.eq.s32.totalorder %s32, 1
      %p206 = por %p204, %p205
      %p208 = scmp.ne.s32.totalorder %s191, %s207
      %p209 = scmp.eq.s32.totalorder %s32, 0
      %p210 = por %p208, %p209
      %p211 = scmp.le.s32.totalorder 1, %s26
      %p212 = scmp.lt.s32.totalorder %s26, 3
      %p213 = pnand %p211, %p212
      %p214 = pneg %p213
      // Predicated region
      $region9: #{tpu_custom_call.1} parent=5 // pred_check
        _
      $region10: #{tpu_custom_call.1} parent=5 // pred_check_branch
        %216 = sbr.rel (%p213) target = $region12
      $region11: #{tpu_custom_call.1} parent=5 // pred_region
        %s217 = ssub.s32 %s26, 1
        // Predicated region
        $region13: #{tpu_custom_call.1} parent=11 // pred_check
          %p218 = pneg %p47
        $region14: #{tpu_custom_call.1} parent=11 // pred_check_branch
          %220 = sbr.rel (%p218) target = $region16
        $region15: #{tpu_custom_call.1} parent=11 // pred_region
          %s222 = ssub.s32 128, 128
          %223 = vsyncadd [#allocation4], %s222
          %s225 = sshll.u32 [#allocation3], 4
          %s226 = int_to_ptr.vmem [resolvable:$true] %s225
          %228 = dma.hbm_to_vmem [thread:$0]  %s0, 128, %s226, [#allocation4]
        $region16: #{tpu_custom_call.1} parent=11 // pred_fallthru
          _
      $region12: #{tpu_custom_call.1} parent=5 // pred_fallthru
        _
      %p229 = scmp.lt.s32.totalorder %s26, 2
      // Predicated region
      $region17: #{tpu_custom_call.1} parent=5 // pred_check
        %p230 = pneg %p229
      $region18: #{tpu_custom_call.1} parent=5 // pred_check_branch
        %232 = sbr.rel (%p230) target = $region20
      $region19: #{tpu_custom_call.1} parent=5 // pred_region
        // Predicated region
        $region21: #{tpu_custom_call.1} parent=19 // pred_check
          %p233 = pneg %p67
        $region22: #{tpu_custom_call.1} parent=19 // pred_check_branch
          %235 = sbr.rel (%p233) target = $region24
        $region23: #{tpu_custom_call.1} parent=19 // pred_region
          %s236 = sand.u32 %s26, 1
          %s237 = scalar_lea.sflag [#allocation7], %s236
          %s238 = sand.u32 %s57, 1
          %s239 = smul.addr %s238, 8
          %s240 = scalar_lea.vmem [#allocation6], %s239
          %s242 = ssub.s32 128, 128
          %243 = vsyncadd %s237, %s242
          %s244 = smul.addr %s26, 128
          %s245 = scalar_lea.hbm %s1, %s244
          %s247 = sshll.u32 %s240, 4
          %s248 = int_to_ptr.vmem [resolvable:$true] %s247
          %250 = dma.hbm_to_vmem [thread:$0]  %s245, 128, %s248, %s237
        $region24: #{tpu_custom_call.1} parent=19 // pred_fallthru
          _
        // Predicated region
        $region25: #{tpu_custom_call.1} parent=19 // pred_check
          %p251 = pneg %p93
        $region26: #{tpu_custom_call.1} parent=19 // pred_check_branch
          %253 = sbr.rel (%p251) target = $region28
        $region27: #{tpu_custom_call.1} parent=19 // pred_region
          %s254 = sand.u32 %s26, 1
          %s255 = scalar_lea.sflag [#allocation7], %s254
          %s256 = sand.u32 %s83, 1
          %s257 = smul.addr %s256, 8
          %s258 = scalar_lea.vmem [#allocation8], %s257
          %s260 = ssub.s32 128, 128
          %261 = vsyncadd %s255, %s260
          %s262 = smul.addr %s26, 128
          %s263 = scalar_lea.hbm %s2, %s262
          %s265 = sshll.u32 %s258, 4
          %s266 = int_to_ptr.vmem [resolvable:$true] %s265
          %268 = dma.hbm_to_vmem [thread:$0]  %s263, 128, %s266, %s255
        $region28: #{tpu_custom_call.1} parent=19 // pred_fallthru
          _
        // Predicated region
        $region29: #{tpu_custom_call.1} parent=19 // pred_check
          %p269 = pneg %p119
        $region30: #{tpu_custom_call.1} parent=19 // pred_check_branch
          %271 = sbr.rel (%p269) target = $region32
        $region31: #{tpu_custom_call.1} parent=19 // pred_region
          %s272 = sand.u32 %s109, 1
          %s273 = scalar_lea.sflag [#allocation10], %s272
          %s274 = sand.u32 %s109, 1
          %s275 = smul.addr %s274, 96
          %s276 = scalar_lea.vmem [#allocation9], %s275
          %s278 = ssub.s32 1536, 1536
          %279 = vsyncadd %s273, %s278
          %s280 = smul.addr %s26, 12
          %s281 = smul.addr %s280, 128
          %s282 = scalar_lea.hbm %s3, %s281
          %s283 = sshll.u32 %s276, 4
          %s284 = int_to_ptr.vmem [resolvable:$true] %s283
          %289 = dma.hbm_to_vmem [thread:$0]  %s282, 1536, %s284, %s273, 128, 128, 8
        $region32: #{tpu_custom_call.1} parent=19 // pred_fallthru
          _
        // Predicated region
        $region33: #{tpu_custom_call.1} parent=19 // pred_check
          %p290 = pneg %p145
        $region34: #{tpu_custom_call.1} parent=19 // pred_check_branch
          %292 = sbr.rel (%p290) target = $region36
        $region35: #{tpu_custom_call.1} parent=19 // pred_region
          %p293 = scmp.lt.s32.totalorder %s26, 1
          %s294 = scalar_select %p293, %s26, 1
          %s295 = scalar_lea.vmem %s4, %s294
        $region36: #{tpu_custom_call.1} parent=19 // pred_fallthru
          _
      $region20: #{tpu_custom_call.1} parent=5 // pred_fallthru
        _
      %p296 = scmp.le.s32.totalorder 1, %s26
      %p297 = scmp.lt.s32.totalorder %s26, 3
      %p298 = pnand %p296, %p297
      %p299 = pneg %p298
      // Predicated region
      $region37: #{tpu_custom_call.1} parent=5 // pred_check
        _
      $region38: #{tpu_custom_call.1} parent=5 // pred_check_branch
        %301 = sbr.rel (%p298) target = $region40
      $region39: #{tpu_custom_call.1} parent=5 // pred_region
        %s302 = ssub.s32 %s26, 1
        // Predicated region
        $region41: #{tpu_custom_call.1} parent=39 // pred_check
          %p303 = pneg %p47
        $region42: #{tpu_custom_call.1} parent=39 // pred_check_branch
          %305 = sbr.rel (%p303) target = $region44
        $region43: #{tpu_custom_call.1} parent=39 // pred_region
          %306 = dma.done [#allocation4], 128
        $region44: #{tpu_custom_call.1} parent=39 // pred_fallthru
          _
        %s307 = sand.u32 %s31, 1
        %s308 = scalar_lea.sflag [#allocation7], %s307
        %s309 = sand.u32 %s60, 1
        %s310 = smul.addr %s309, 8
        %s311 = scalar_lea.vmem [#allocation6], %s310
        // Predicated region
        $region45: #{tpu_custom_call.1} parent=39 // pred_check
          %p312 = pneg %p73
        $region46: #{tpu_custom_call.1} parent=39 // pred_check_branch
          %314 = sbr.rel (%p312) target = $region48
        $region47: #{tpu_custom_call.1} parent=39 // pred_region
          %315 = dma.done %s308, 128
        $region48: #{tpu_custom_call.1} parent=39 // pred_fallthru
          _
        %s316 = sand.u32 %s31, 1
        %s317 = scalar_lea.sflag [#allocation7], %s316
        %s318 = sand.u32 %s86, 1
        %s319 = smul.addr %s318, 8
        %s320 = scalar_lea.vmem [#allocation8], %s319
        // Predicated region
        $region49: #{tpu_custom_call.1} parent=39 // pred_check
          %p321 = pneg %p99
        $region50: #{tpu_custom_call.1} parent=39 // pred_check_branch
          %323 = sbr.rel (%p321) target = $region52
        $region51: #{tpu_custom_call.1} parent=39 // pred_region
          %324 = dma.done %s317, 128
        $region52: #{tpu_custom_call.1} parent=39 // pred_fallthru
          _
        %s325 = sand.u32 %s112, 1
        %s326 = scalar_lea.sflag [#allocation10], %s325
        %s327 = sand.u32 %s112, 1
        %s328 = smul.addr %s327, 96
        %s329 = scalar_lea.vmem [#allocation9], %s328
        // Predicated region
        $region53: #{tpu_custom_call.1} parent=39 // pred_check
          %p330 = pneg %p125
        $region54: #{tpu_custom_call.1} parent=39 // pred_check_branch
          %332 = sbr.rel (%p330) target = $region56
        $region55: #{tpu_custom_call.1} parent=39 // pred_region
          %333 = dma.done %s326, 1536
        $region56: #{tpu_custom_call.1} parent=39 // pred_fallthru
          _
        %p334 = pneg %p47
        %p335 = pneg %p44
        %s336 = sand.u32 %s31, 1
        %s337 = scalar_lea.sflag [#allocation7], %s336
        %s338 = sand.u32 %s60, 1
        %s339 = smul.addr %s338, 8
        %s340 = scalar_lea.vmem [#allocation6], %s339
        %p341 = pneg %p73
        %p342 = pneg %p70
        %s343 = sand.u32 %s31, 1
        %s344 = scalar_lea.sflag [#allocation7], %s343
        %s345 = sand.u32 %s86, 1
        %s346 = smul.addr %s345, 8
        %s347 = scalar_lea.vmem [#allocation8], %s346
        %p348 = pneg %p99
        %p349 = pneg %p96
        %s350 = sand.u32 %s112, 1
        %s351 = scalar_lea.sflag [#allocation10], %s350
        %s352 = sand.u32 %s112, 1
        %s353 = smul.addr %s352, 96
        %s354 = scalar_lea.vmem [#allocation9], %s353
        %p355 = pneg %p125
        %p356 = pneg %p122
        %p357 = scmp.lt.s32.totalorder %s31, 1
        %s358 = scalar_select %p357, %s31, 1
        %s359 = scalar_lea.vmem %s4, %s358
        %p360 = pneg %p151
        %p361 = pneg %p148
        %p362 = pneg %p177
        %p363 = pneg %p174
        %s364 = sand.u32 %s164, 1
        %s365 = scalar_lea.sflag [#allocation5], %s364
        %s366 = sand.u32 %s164, 1
        %s367 = smul.addr %s366, 8
        %s368 = scalar_lea.vmem [#allocation11], %s367
        %p369 = pneg %p203
        %p370 = pneg %p200
        %s371 = sand.u32 %s190, 1
        %s372 = scalar_lea.sflag [#allocation13], %s371
        %s373 = sand.u32 %s190, 1
        %s374 = smul.addr %s373, 8
        %s375 = scalar_lea.vmem [#allocation12], %s374
        %p376 = scmp.lt.s32.totalorder %s31, 1
        %s377 = scalar_select %p376, %s31, 1
        %s378 = scalar_lea.vmem %s4, %s377
        %p379 = scmp.eq.s32.totalorder %s31, 0
        // Predicated region
        $region57: #{tpu_custom_call.1} parent=39 // pred_check
          %p380 = pneg %p379
        $region58: #{tpu_custom_call.1} parent=39 // pred_check_branch
          %382 = sbr.rel (%p380) target = $region60
        $region59: #{tpu_custom_call.1} parent=39 // pred_region
          %v383 = vld [vmem:[#allocation3] sm:$0xff]
          %vm384 = vcmask 523264
          %385 = vst.msk [vmem:[#allocation2] sm:$0xff] %vm384, %v383
        $region60: #{tpu_custom_call.1} parent=39 // pred_fallthru
          _
        %v386 = vld [vmem:[%s311] sm:$0xff]
        %388 = vrot.lane.b32.xlu0 %v386, 64
        %v389 = vpop.permute.xlu0 %388
        %vm391 = vcmask 785920
        %392 = vst.msk [vmem:[#allocation2] sm:$0xff] %vm391, %v389
        %v393 = vld [vmem:[#allocation2] sm:$0xff]
        %v394 = vld [vmem:[%s329] sm:$0xff]
        %v395 = vld [vmem:[%s329 + $0x8] sm:$0xff]
        %v396 = vld [vmem:[%s329 + $0x10] sm:$0xff]
        %v397 = vld [vmem:[%s329 + $0x18] sm:$0xff]
        %v398 = vld [vmem:[%s329 + $0x20] sm:$0xff]
        %v399 = vld [vmem:[%s329 + $0x28] sm:$0xff]
        %v400 = vld [vmem:[%s329 + $0x30] sm:$0xff]
        %v401 = vld [vmem:[%s329 + $0x38] sm:$0xff]
        %v402 = vld [vmem:[%s329 + $0x40] sm:$0xff]
        %v403 = vld [vmem:[%s329 + $0x48] sm:$0xff]
        %v404 = vld [vmem:[%s329 + $0x50] sm:$0xff]
        %v405 = vld [vmem:[%s329 + $0x58] sm:$0xff]
        %v406 = vld [vmem:[%s378] sm:$0x1]
        %v408 = vlaneseq
        %v409 = vshrl.u32 %v408, 7
        %v410 = vsub.s32 0, %v409
        %v411 = vrot.slane %v406, %v410
        %vm413 = vcmask 785408
        %v415 = vsel %vm413, %v393, 0
        %417 = vmatprep.subr.mxu0 0.0
        %418 = vmatpush1.msra.mxu0 %v394
        %419 = vmatprep.subr.mxu0 0.0
        %420 = vmatpush1.msra.mxu0 %v395
        %421 = vmatprep.subr.mxu0 0.0
        %422 = vmatpush1.msra.mxu0 %v396
        %423 = vmatprep.subr.mxu0 0.0
        %424 = vmatpush1.msra.mxu0 %v397
        %425 = vmatprep.subr.mxu0 0.0
        %426 = vmatpush1.msra.mxu0 %v398
        %427 = vmatprep.subr.mxu0 0.0
        %428 = vmatpush1.msra.mxu0 %v399
        %429 = vmatprep.subr.mxu0 0.0
        %430 = vmatpush1.msra.mxu0 %v400
        %431 = vmatprep.subr.mxu0 0.0
        %432 = vmatpush1.msra.mxu0 %v401
        %433 = vmatprep.subr.mxu0 0.0
        %434 = vmatpush1.msra.mxu0 %v402
        %435 = vmatprep.subr.mxu0 0.0
        %436 = vmatpush1.msra.mxu0 %v403
        %437 = vmatprep.subr.mxu0 0.0
        %438 = vmatpush1.msra.mxu0 %v404
        %439 = vmatprep.subr.mxu0 0.0
        %440 = vmatpush1.msra.mxu0 %v405
        %441 = vmatprep.subr.mxu0 0.0
        %442 = vmatpush1.msra.mxu0 0.0
        %443 = vmatprep.subr.mxu0 0.0
        %444 = vmatpush1.msra.mxu0 0.0
        %445 = vmatprep.subr.mxu0 0.0
        %446 = vmatpush1.msra.mxu0 0.0
        %447 = vmatprep.subr.mxu0 0.0
        %448 = vmatpush1.msra.mxu0 0.0
        %449 = vmatprep.subr.mxu0 0.0
        %450 = vmatpush1.msra.mxu0 0.0
        %451 = vmatprep.subr.mxu0 0.0
        %452 = vmatpush1.msra.mxu0 0.0
        %453 = vmatprep.subr.mxu0 0.0
        %454 = vmatpush1.msra.mxu0 0.0
        %455 = vmatprep.subr.mxu0 0.0
        %456 = vmatpush1.msra.mxu0 0.0
        %457 = vmatprep.subr.mxu0 0.0
        %458 = vmatpush1.msra.mxu0 0.0
        %459 = vmatprep.subr.mxu0 0.0
        %460 = vmatpush1.msra.mxu0 0.0
        %461 = vmatprep.subr.mxu0 0.0
        %462 = vmatpush1.msra.mxu0 0.0
        %463 = vmatprep.subr.mxu0 0.0
        %464 = vmatpush1.msra.mxu0 0.0
        %465 = vmatprep.subr.mxu0 0.0
        %466 = vmatpush1.msra.mxu0 0.0
        %467 = vmatprep.subr.mxu0 0.0
        %468 = vmatpush1.msra.mxu0 0.0
        %469 = vmatprep.subr.mxu0 0.0
        %470 = vmatpush1.msra.mxu0 0.0
        %471 = vmatprep.subr.mxu0 0.0
        %472 = vmatpush1.msra.mxu0 0.0
        %473 = vmatprep.subr.mxu0 0.0
        %474 = vmatpush1.msra.mxu0 0.0
        %475 = vmatprep.subr.mxu0 0.0
        %476 = vmatpush1.msra.mxu0 0.0
        %477 = vmatprep.subr.mxu0 0.0
        %478 = vmatpush1.msra.mxu0 0.0
        %479 = vmatprep.subr.mxu0 0.0
        %480 = vmatpush1.msra.mxu0 0.0
        %481 = vmatprep.mubr.f32.mxu0 0.0
        %482 = vmatmul.mubr.f32.gmra.mrb[0].mxu0 %v415
        %v483 = vpop.f32.mrb[0].mxu0
        %v484 = vadd.f32 %v411, %v483
        %v485 = vpop.f32.mrb[0].mxu0
        %486 = vdwg.mxu0
        %v487 = vxor.u32 %v484, 2147483648
        %v488 = vmul.f32 %v487, 1.442695
        %v489 = vpow.pop %v488
        %v490 = vadd.f32 %v489, 1.0
        %v491 = vrcp.pop %v490
        %v492 = vmul.f32 1.0, %v491
        %v493 = vtanh.pop %v484
        %v494 = vld [vmem:[%s320] sm:$0xff]
        %496 = vrot.lane.b32.xlu0 %v494, 32
        %v497 = vpop.permute.xlu0 %496
        %v499 = vmul.f32 %v492, %v497
        %501 = vrot.lane.b32.xlu0 %v493, 32
        %v502 = vpop.permute.xlu0 %501
        %v504 = vmul.f32 %v492, %v502
        %506 = vrot.lane.b32.xlu0 %v504, 32
        %v507 = vpop.permute.xlu0 %506
        %v509 = vadd.f32 %v499, %v507
        %v510 = vtanh.pop %v509
        %512 = vrot.lane.b32.xlu0 %v510, 32
        %v513 = vpop.permute.xlu0 %512
        %v515 = vmul.f32 %v492, %v513
        %517 = vrot.lane.b32.xlu0 %v515, 64
        %v518 = vpop.permute.xlu0 %517
        %vm520 = vcmask 261120
        %521 = vst.msk [vmem:[%s368] sm:$0xff] %vm520, %v518
        %523 = vrot.lane.b32.xlu0 %v509, 96
        %v524 = vpop.permute.xlu0 %523
        %526 = vst.msk [vmem:[%s375] sm:$0xff] %vm520, %v524
        %s527 = sadd.s32 %s31, 1
        %p528 = scmp.lt.s32.totalorder %s527, 2
        // Predicated region
        $region61: #{tpu_custom_call.1} parent=39 // pred_check
          %p529 = pneg %p528
        $region62: #{tpu_custom_call.1} parent=39 // pred_check_branch
          %531 = sbr.rel (%p529) target = $region64
        $region63: #{tpu_custom_call.1} parent=39 // pred_region
          %532 = vst.msk [vmem:[#allocation2] sm:$0xff] %vm520, %v518
        $region64: #{tpu_custom_call.1} parent=39 // pred_fallthru
          _
        %s533 = sand.u32 %s164, 1
        %s534 = scalar_lea.sflag [#allocation5], %s533
        %s535 = sand.u32 %s164, 1
        %s536 = smul.addr %s535, 8
        %s537 = scalar_lea.vmem [#allocation11], %s536
        %s538 = sand.u32 %s190, 1
        %s539 = scalar_lea.sflag [#allocation13], %s538
        %s540 = sand.u32 %s190, 1
        %s541 = smul.addr %s540, 8
        %s542 = scalar_lea.vmem [#allocation12], %s541
        // Predicated region
        $region65: #{tpu_custom_call.1} parent=39 // pred_check
          %p543 = pneg %p174
        $region66: #{tpu_custom_call.1} parent=39 // pred_check_branch
          %545 = sbr.rel (%p543) target = $region68
        $region67: #{tpu_custom_call.1} parent=39 // pred_region
          %s547 = ssub.s32 128, 128
          %548 = vsyncadd %s534, %s547
          %s549 = smul.addr %s31, 128
          %s550 = scalar_lea.hbm %s5, %s549
          %s552 = sshll.u32 %s537, 4
          %s553 = int_to_ptr.vmem [resolvable:$true] %s552
          %555 = dma.vmem_to_hbm [thread:$0]  %s553, 128, %s550, %s534
        $region68: #{tpu_custom_call.1} parent=39 // pred_fallthru
          _
        // Predicated region
        $region69: #{tpu_custom_call.1} parent=39 // pred_check
          %p556 = pneg %p200
        $region70: #{tpu_custom_call.1} parent=39 // pred_check_branch
          %558 = sbr.rel (%p556) target = $region72
        $region71: #{tpu_custom_call.1} parent=39 // pred_region
          %s560 = ssub.s32 128, 128
          %561 = vsyncadd %s539, %s560
          %s562 = smul.addr %s31, 128
          %s563 = scalar_lea.hbm %s6, %s562
          %s565 = sshll.u32 %s542, 4
          %s566 = int_to_ptr.vmem [resolvable:$true] %s565
          %568 = dma.vmem_to_hbm [thread:$0]  %s566, 128, %s563, %s539
        $region72: #{tpu_custom_call.1} parent=39 // pred_fallthru
          _
      $region40: #{tpu_custom_call.1} parent=5 // pred_fallthru
        _
      %p569 = scmp.le.s32.totalorder 2, %s26
      // Predicated region
      $region73: #{tpu_custom_call.1} parent=5 // pred_check
        %p570 = pneg %p569
      $region74: #{tpu_custom_call.1} parent=5 // pred_check_branch
        %572 = sbr.rel (%p570) target = $region76
      $region75: #{tpu_custom_call.1} parent=5 // pred_region
        %s573 = ssub.s32 %s26, 2
        // Predicated region
        $region77: #{tpu_custom_call.1} parent=75 // pred_check
          %p574 = pneg %p180
        $region78: #{tpu_custom_call.1} parent=75 // pred_check_branch
          %576 = sbr.rel (%p574) target = $region80
        $region79: #{tpu_custom_call.1} parent=75 // pred_region
          %s577 = sand.u32 %s165, 1
          %s578 = scalar_lea.sflag [#allocation5], %s577
          %s579 = sand.u32 %s165, 1
          %s580 = smul.addr %s579, 8
          %s581 = scalar_lea.vmem [#allocation11], %s580
          %582 = dma.done %s578, 128
        $region80: #{tpu_custom_call.1} parent=75 // pred_fallthru
          _
        // Predicated region
        $region81: #{tpu_custom_call.1} parent=75 // pred_check
          %p583 = pneg %p206
        $region82: #{tpu_custom_call.1} parent=75 // pred_check_branch
          %585 = sbr.rel (%p583) target = $region84
        $region83: #{tpu_custom_call.1} parent=75 // pred_region
          %s586 = sand.u32 %s191, 1
          %s587 = scalar_lea.sflag [#allocation13], %s586
          %s588 = sand.u32 %s191, 1
          %s589 = smul.addr %s588, 8
          %s590 = scalar_lea.vmem [#allocation12], %s589
          %591 = dma.done %s587, 128
        $region84: #{tpu_custom_call.1} parent=75 // pred_fallthru
          _
      $region76: #{tpu_custom_call.1} parent=5 // pred_fallthru
        _
    $region6: #{tpu_custom_call.1} parent=1 // loop_footer
      %s30 = sadd.s32 1, %s26
    $region7: #{tpu_custom_call.1} parent=1 // loop_footer_branch
      %25 = sbr.rel target = $region3
    $region8: #{tpu_custom_call.1} parent=1 // loop_exit
      _
    %592 = vsyncpa [#allocation4], 1
    %s593 = scalar_lea.sflag [#allocation4], 1
    %594 = vsyncpa %s593, 1
    %595 = vsyncpa [#allocation7], 1
    %s596 = scalar_lea.sflag [#allocation7], 1
    %597 = vsyncpa %s596, 1
    %598 = vsyncpa [#allocation10], 1
    %s599 = scalar_lea.sflag [#allocation10], 1
    %600 = vsyncpa %s599, 1
    %601 = vsyncpa [#allocation5], 1
    %s602 = scalar_lea.sflag [#allocation5], 1
    %603 = vsyncpa %s602, 1
    %604 = vsyncpa [#allocation13], 1
    %s605 = scalar_lea.sflag [#allocation13], 1
    %606 = vsyncpa %s605, 1

</llo_original>
